<compile_context>
chip_gen: v7x
topology: tpu7x:2x2x1
jax: 0.10.0
libtpu: 0.0.40
codegen_flags: <defaults>
</compile_context>

<pallas_src>
import functools

import jax
import jax.numpy as jnp
from jax import lax
from jax.experimental import pallas as pl
from jax.experimental.pallas import tpu as pltpu
import numpy as np


# ----------------------------- Pallas kernel ------------------------------ #

def _gru_model_kernel(x_ref,                        # [T*B, E]  time-major, flattened
                      wp_ref, bp_ref,               # [E, P], [1, P]
                      wif_ref, whf_ref, bif_ref, bhnf_ref,  # fwd: [P,3H],[H,3H],[1,3H],[1,H]
                      wib_ref, whb_ref, bib_ref, bhnb_ref,  # bwd: same shapes
                      wdf_ref, wdb_ref, bd_ref,     # [H, D], [H, D], [1, D]
                      wo_ref, bo_ref,               # [D, n_out], [1, n_out]
                      out_ref,                      # [B, n_out]
                      gif_scratch, gib_scratch,     # VMEM [T, B, 3H] each
                      *, B, T, H):
    # ---- batched projection + ReLU: one MXU push instead of T ----
    xp = jnp.maximum(
        jnp.dot(x_ref[...], wp_ref[...], preferred_element_type=jnp.float32)
        + bp_ref[...], 0.0)                                          # [T*B, P]

    # ---- precompute input-gate pre-activations (biases folded) ----
    gif_scratch[...] = (
        jnp.dot(xp, wif_ref[...], preferred_element_type=jnp.float32)
        + bif_ref[...]).reshape(T, B, 3 * H)
    gib_scratch[...] = (
        jnp.dot(xp, wib_ref[...], preferred_element_type=jnp.float32)
        + bib_ref[...]).reshape(T, B, 3 * H)

    # ---- hoist loop invariants out of the recurrence ----
    whf = whf_ref[...]                                               # [H, 3H]
    whb = whb_ref[...]
    bhn_f = jnp.broadcast_to(bhnf_ref[...], (B, H))                  # pre-broadcast once
    bhn_b = jnp.broadcast_to(bhnb_ref[...], (B, H))

    def gru_step(gi, gh, bhn, h):
        # PyTorch gate order (r, z, n); bh_n stays inside r*(...).
        r = jax.nn.sigmoid(gi[:, :H] + gh[:, :H])
        z = jax.nn.sigmoid(gi[:, H:2 * H] + gh[:, H:2 * H])
        n = jnp.tanh(gi[:, 2 * H:] + r * (gh[:, 2 * H:] + bhn))
        return (1.0 - z) * n + z * h

    # ---- interleaved fwd/bwd recurrence + running max (global max pool) ----
    def body(i, carry):
        h_f, h_b, mx_f, mx_b = carry
        gi_f = gif_scratch[i]                                        # [B, 3H]
        gi_b = gib_scratch[T - 1 - i]                                # [B, 3H]
        gh_f = jnp.dot(h_f, whf, preferred_element_type=jnp.float32)  # [B, 3H]
        gh_b = jnp.dot(h_b, whb, preferred_element_type=jnp.float32)
        h_f = gru_step(gi_f, gh_f, bhn_f, h_f)
        h_b = gru_step(gi_b, gh_b, bhn_b, h_b)
        return h_f, h_b, jnp.maximum(mx_f, h_f), jnp.maximum(mx_b, h_b)

    zeros = jnp.zeros((B, H), jnp.float32)
    neg_inf = jnp.full((B, H), -jnp.inf, jnp.float32)   # T >= 1 assumed
    _, _, mx_f, mx_b = lax.fori_loop(0, T, body, (zeros, zeros, neg_inf, neg_inf))

    # ---- dense head: split-wd form avoids a lane-dim concat ----
    dense = jnp.maximum(
        jnp.dot(mx_f, wdf_ref[...], preferred_element_type=jnp.float32)
        + jnp.dot(mx_b, wdb_ref[...], preferred_element_type=jnp.float32)
        + bd_ref[...], 0.0)                                          # [B, D]
    out_ref[...] = (
        jnp.dot(dense, wo_ref[...], preferred_element_type=jnp.float32)
        + bo_ref[...]).astype(out_ref.dtype)                         # [B, n_out]


# ------------------------------- wrapper ----------------------------------- #

def gru_model_forward(token_ids, params):
    """token_ids: int32 [B, T].  Returns float32 [B, n_out]."""
    emb = jnp.take(params["embed"], token_ids, axis=0)       # [B, T, E]  glue gather
    B, T, E = emb.shape
    x_flat = jnp.transpose(emb, (1, 0, 2)).reshape(T * B, E)  # time-major, flattened
    P = params["wp"].shape[1]
    H = params["whf"].shape[-1]
    n_out = params["wo"].shape[1]

    # Host-side packing: gate weights -> [in, 3H] (gate order r, z, n);
    # fold bi+bh for r,z and bi for n into one [1, 3H] bias; keep bh_n apart.
    def pack_w(w):                         # [3, in, H] -> [in, 3H]
        return jnp.concatenate([w[0], w[1], w[2]], axis=-1)

    def pack_bias(bi, bh):                 # [3,1,H] x2 -> [1, 3H]
        return jnp.concatenate([bi[0] + bh[0], bi[1] + bh[1], bi[2]], axis=-1)

    wif_p, whf_p = pack_w(params["wif"]), pack_w(params["whf"])
    wib_p, whb_p = pack_w(params["wib"]), pack_w(params["whb"])
    bif_all = pack_bias(params["bif"], params["bhf"])
    bib_all = pack_bias(params["bib"], params["bhb"])
    bhn_f = params["bhf"][2]               # [1, H]
    bhn_b = params["bhb"][2]
    wd_f = params["wd"][:H]                # [H, D]
    wd_b = params["wd"][H:]                # [H, D]

    kernel = functools.partial(_gru_model_kernel, B=B, T=T, H=H)
    args = (x_flat,
            params["wp"], params["bp"],
            wif_p, whf_p, bif_all, bhn_f,
            wib_p, whb_p, bib_all, bhn_b,
            wd_f, wd_b, params["bd"],
            params["wo"], params["bo"])

    vmem = pl.BlockSpec(memory_space=pltpu.MemorySpace.VMEM)
    return pl.pallas_call(
        kernel,
        out_shape=jax.ShapeDtypeStruct((B, n_out), jnp.float32),
        in_specs=[vmem] * len(args),
        out_specs=vmem,
        scratch_shapes=[pltpu.VMEM((T, B, 3 * H), jnp.float32),
                        pltpu.VMEM((T, B, 3 * H), jnp.float32)],
    )(*args)
    # TODO(synk): for large B, add a batch grid (tb multiple of 8) with
    # BlockSpec-tiled x and "parallel" dimension_semantics (megacore on v7x).


# -------------------------- deterministic params --------------------------- #

def _xavier_uniform(key, shape):
    fan_in, fan_out = shape[-2], shape[-1]
    limit = float(np.sqrt(6.0 / (fan_in + fan_out)))
    return jax.random.uniform(key, shape, jnp.float32, -limit, limit)


def _small_uniform(key, shape, fan):
    limit = 1.0 / float(np.sqrt(fan))
    return jax.random.uniform(key, shape, jnp.float32, -limit, limit)


def make_params(key, n_vocab, E, P, H, D, n_out):
    ks = jax.random.split(key, 20)
    embed = jax.random.normal(ks[0], (n_vocab, E), jnp.float32)
    embed = embed.at[0].set(0.0)                             # padding_idx = 0
    params = {
        "embed": embed,
        "wp": _xavier_uniform(ks[1], (E, P)),  "bp": _small_uniform(ks[2], (1, P), E),
        # forward GRU (gate order r, z, n)
        "wif": _xavier_uniform(ks[3], (3, P, H)), "whf": _xavier_uniform(ks[4], (3, H, H)),
        "bif": _small_uniform(ks[5], (3, 1, H), H), "bhf": _small_uniform(ks[6], (3, 1, H), H),
        # backward GRU
        "wib": _xavier_uniform(ks[7], (3, P, H)), "whb": _xavier_uniform(ks[8], (3, H, H)),
        "bib": _small_uniform(ks[9], (3, 1, H), H), "bhb": _small_uniform(ks[10], (3, 1, H), H),
        "wd": _xavier_uniform(ks[11], (2 * H, D)), "bd": _small_uniform(ks[12], (1, D), 2 * H),
        "wo": _xavier_uniform(ks[13], (D, n_out)), "bo": _small_uniform(ks[14], (1, n_out), D),
    }
    return params


# ------------------------- pure-JAX reference ------------------------------ #

def reference_forward(token_ids, p):
    emb = jnp.take(p["embed"], token_ids, axis=0)            # [B, T, E]
    x = jax.nn.relu(emb @ p["wp"] + p["bp"])                 # [B, T, P]
    H = p["whf"].shape[-1]

    def run_dir(wi, wh, bi, bh, xs):                         # xs: [T, B, P]
        def step(h, xt):
            gi = [xt @ wi[g] + bi[g] for g in range(3)]
            gh = [h @ wh[g] + bh[g] for g in range(3)]
            r = jax.nn.sigmoid(gi[0] + gh[0])
            z = jax.nn.sigmoid(gi[1] + gh[1])
            n = jnp.tanh(gi[2] + r * gh[2])
            hn = (1.0 - z) * n + z * h
            return hn, hn
        h0 = jnp.zeros((xs.shape[1], H), jnp.float32)
        _, hs = lax.scan(step, h0, xs)
        return hs                                            # [T, B, H]

    xs = jnp.transpose(x, (1, 0, 2))
    hf = run_dir(p["wif"], p["whf"], p["bif"], p["bhf"], xs)
    hb = run_dir(p["wib"], p["whb"], p["bib"], p["bhb"], xs[::-1])[::-1]
    seq = jnp.concatenate([hf, hb], axis=-1)                 # [T, B, 2H]
    pooled = jnp.max(seq, axis=0)                            # [B, 2H]
    d = jax.nn.relu(pooled @ p["wd"] + p["bd"])
    return d @ p["wo"] + p["bo"]


# ---------------------------------- main ----------------------------------- #

if __name__ == "__main__":
    # small shapes consistent with the module's forward
    n_vocab, E, P, H, n_out = 1000, 64, 32, 32, 1
    D = 2 * H                                                # dense_dim = 2*rnn_dim (bidirectional)
    B, T = 2, 8

    key = jax.random.PRNGKey(0)
    k_tok, k_par = jax.random.split(key)
    token_ids = jax.random.randint(k_tok, (B, T), 0, n_vocab, dtype=jnp.int32)
    params = make_params(k_par, n_vocab, E, P, H, D, n_out)

    out = gru_model_forward(token_ids, params)
    out = jax.block_until_ready(out)

    ref = jax.block_until_ready(reference_forward(token_ids, params))
    np.testing.assert_allclose(np.asarray(out), np.asarray(ref), rtol=1e-4, atol=1e-4)

    print("KERNEL_OK")
</pallas_src>

<mosaic_0001>
module attributes {stable_mosaic.version = 11 : i64} {
  func.func @_gru_model_kernel(%arg0: memref<16x64xf32, #tpu.memory_space<vmem>>, %arg1: memref<64x32xf32, #tpu.memory_space<vmem>>, %arg2: memref<1x32xf32, #tpu.memory_space<vmem>>, %arg3: memref<32x96xf32, #tpu.memory_space<vmem>>, %arg4: memref<32x96xf32, #tpu.memory_space<vmem>>, %arg5: memref<1x96xf32, #tpu.memory_space<vmem>>, %arg6: memref<1x32xf32, #tpu.memory_space<vmem>>, %arg7: memref<32x96xf32, #tpu.memory_space<vmem>>, %arg8: memref<32x96xf32, #tpu.memory_space<vmem>>, %arg9: memref<1x96xf32, #tpu.memory_space<vmem>>, %arg10: memref<1x32xf32, #tpu.memory_space<vmem>>, %arg11: memref<32x64xf32, #tpu.memory_space<vmem>>, %arg12: memref<32x64xf32, #tpu.memory_space<vmem>>, %arg13: memref<1x64xf32, #tpu.memory_space<vmem>>, %arg14: memref<64x1xf32, #tpu.memory_space<vmem>>, %arg15: memref<1x1xf32, #tpu.memory_space<vmem>>, %arg16: memref<2x1xf32, #tpu.memory_space<vmem>>, %arg17: memref<8x2x96xf32, #tpu.memory_space<vmem>>, %arg18: memref<8x2x96xf32, #tpu.memory_space<vmem>>) attributes {dimension_semantics = [], scalar_prefetch = 0 : i64, scratch_operands = 2 : i64, tpu.core_type = #tpu.core_type<tc>} {
    %c0 = arith.constant 0 : index
    %c0_0 = arith.constant 0 : index
    %0 = vector.load %arg0[%c0, %c0_0] : memref<16x64xf32, #tpu.memory_space<vmem>>, vector<16x64xf32>
    %c0_1 = arith.constant 0 : index
    %c0_2 = arith.constant 0 : index
    %1 = vector.load %arg1[%c0_1, %c0_2] : memref<64x32xf32, #tpu.memory_space<vmem>>, vector<64x32xf32>
    %cst = arith.constant dense<0.000000e+00> : vector<16x32xf32>
    %2 = tpu.matmul %0, %1, %cst {dimension_numbers = #tpu.dot_dimension_numbers<[1], [0], [0], [1], [0, 0, 1, 1], [], []>} : vector<16x64xf32>, vector<64x32xf32>, vector<16x32xf32> -> vector<16x32xf32>
    %c0_3 = arith.constant 0 : index
    %c0_4 = arith.constant 0 : index
    %3 = vector.load %arg2[%c0_3, %c0_4] : memref<1x32xf32, #tpu.memory_space<vmem>>, vector<1x32xf32>
    %4 = vector.broadcast %3 : vector<1x32xf32> to vector<16x32xf32>
    %5 = arith.addf %2, %4 : vector<16x32xf32>
    %cst_5 = arith.constant 0.000000e+00 : f32
    %6 = vector.broadcast %cst_5 : f32 to vector<16x32xf32>
    %7 = arith.maximumf %5, %6 : vector<16x32xf32>
    %c0_6 = arith.constant 0 : index
    %c0_7 = arith.constant 0 : index
    %8 = vector.load %arg3[%c0_6, %c0_7] : memref<32x96xf32, #tpu.memory_space<vmem>>, vector<32x96xf32>
    %cst_8 = arith.constant dense<0.000000e+00> : vector<16x96xf32>
    %9 = tpu.matmul %7, %8, %cst_8 {dimension_numbers = #tpu.dot_dimension_numbers<[1], [0], [0], [1], [0, 0, 1, 1], [], []>} : vector<16x32xf32>, vector<32x96xf32>, vector<16x96xf32> -> vector<16x96xf32>
    %c0_9 = arith.constant 0 : index
    %c0_10 = arith.constant 0 : index
    %10 = vector.load %arg5[%c0_9, %c0_10] : memref<1x96xf32, #tpu.memory_space<vmem>>, vector<1x96xf32>
    %11 = vector.broadcast %10 : vector<1x96xf32> to vector<16x96xf32>
    %12 = arith.addf %9, %11 : vector<16x96xf32>
    %13 = vector.shape_cast %12 : vector<16x96xf32> to vector<8x2x96xf32>
    %c0_11 = arith.constant 0 : index
    %c0_12 = arith.constant 0 : index
    %c0_13 = arith.constant 0 : index
    %14 = vector.load %arg17[%c0_11, %c0_12, %c0_13] : memref<8x2x96xf32, #tpu.memory_space<vmem>>, vector<8x2x96xf32>
    tpu.vector_store %arg17[%c0_11, %c0_12, %c0_13], %13 {strides = array<i32>} : memref<8x2x96xf32, #tpu.memory_space<vmem>>, vector<8x2x96xf32>,
    %c0_14 = arith.constant 0 : index
    %c0_15 = arith.constant 0 : index
    %15 = vector.load %arg7[%c0_14, %c0_15] : memref<32x96xf32, #tpu.memory_space<vmem>>, vector<32x96xf32>
    %cst_16 = arith.constant dense<0.000000e+00> : vector<16x96xf32>
    %16 = tpu.matmul %7, %15, %cst_16 {dimension_numbers = #tpu.dot_dimension_numbers<[1], [0], [0], [1], [0, 0, 1, 1], [], []>} : vector<16x32xf32>, vector<32x96xf32>, vector<16x96xf32> -> vector<16x96xf32>
    %c0_17 = arith.constant 0 : index
    %c0_18 = arith.constant 0 : index
    %17 = vector.load %arg9[%c0_17, %c0_18] : memref<1x96xf32, #tpu.memory_space<vmem>>, vector<1x96xf32>
    %18 = vector.broadcast %17 : vector<1x96xf32> to vector<16x96xf32>
    %19 = arith.addf %16, %18 : vector<16x96xf32>
    %20 = vector.shape_cast %19 : vector<16x96xf32> to vector<8x2x96xf32>
    %c0_19 = arith.constant 0 : index
    %c0_20 = arith.constant 0 : index
    %c0_21 = arith.constant 0 : index
    %21 = vector.load %arg18[%c0_19, %c0_20, %c0_21] : memref<8x2x96xf32, #tpu.memory_space<vmem>>, vector<8x2x96xf32>
    tpu.vector_store %arg18[%c0_19, %c0_20, %c0_21], %20 {strides = array<i32>} : memref<8x2x96xf32, #tpu.memory_space<vmem>>, vector<8x2x96xf32>,
    %c0_22 = arith.constant 0 : index
    %c0_23 = arith.constant 0 : index
    %22 = vector.load %arg4[%c0_22, %c0_23] : memref<32x96xf32, #tpu.memory_space<vmem>>, vector<32x96xf32>
    %c0_24 = arith.constant 0 : index
    %c0_25 = arith.constant 0 : index
    %23 = vector.load %arg8[%c0_24, %c0_25] : memref<32x96xf32, #tpu.memory_space<vmem>>, vector<32x96xf32>
    %c0_26 = arith.constant 0 : index
    %c0_27 = arith.constant 0 : index
    %24 = vector.load %arg6[%c0_26, %c0_27] : memref<1x32xf32, #tpu.memory_space<vmem>>, vector<1x32xf32>
    %25 = vector.shape_cast %24 : vector<1x32xf32> to vector<1x32xf32>
    %26 = vector.broadcast %25 : vector<1x32xf32> to vector<2x32xf32>
    %c0_28 = arith.constant 0 : index
    %c0_29 = arith.constant 0 : index
    %27 = vector.load %arg10[%c0_28, %c0_29] : memref<1x32xf32, #tpu.memory_space<vmem>>, vector<1x32xf32>
    %28 = vector.shape_cast %27 : vector<1x32xf32> to vector<1x32xf32>
    %29 = vector.broadcast %28 : vector<1x32xf32> to vector<2x32xf32>
    %cst_30 = arith.constant 0.000000e+00 : f32
    %30 = vector.broadcast %cst_30 : f32 to vector<2x32xf32>
    %cst_31 = arith.constant 0xFF800000 : f32
    %31 = vector.broadcast %cst_31 : f32 to vector<2x32xf32>
    %c0_i32 = arith.constant 0 : i32
    %c8_i32 = arith.constant 8 : i32
    %32 = arith.addi %c0_i32, %c8_i32 : i32
    %c1_i32 = arith.constant 1 : i32
    %33:4 = scf.for %arg19 = %c0_i32 to %32 step %c1_i32 iter_args(%arg20 = %30, %arg21 = %30, %arg22 = %31, %arg23 = %31) -> (vector<2x32xf32>, vector<2x32xf32>, vector<2x32xf32>, vector<2x32xf32>)  : i32 {
      %50 = arith.index_cast %arg19 : i32 to index
      %c0_49 = arith.constant 0 : index
      %c0_50 = arith.constant 0 : index
      %51 = vector.load %arg17[%50, %c0_49, %c0_50] : memref<8x2x96xf32, #tpu.memory_space<vmem>>, vector<1x2x96xf32>
      %52 = vector.shape_cast %51 : vector<1x2x96xf32> to vector<2x96xf32>
      %c7_i32 = arith.constant 7 : i32
      %53 = arith.subi %c7_i32, %arg19 : i32
      %54 = arith.index_cast %53 : i32 to index
      %c0_51 = arith.constant 0 : index
      %c0_52 = arith.constant 0 : index
      %55 = vector.load %arg18[%54, %c0_51, %c0_52] : memref<8x2x96xf32, #tpu.memory_space<vmem>>, vector<1x2x96xf32>
      %56 = vector.shape_cast %55 : vector<1x2x96xf32> to vector<2x96xf32>
      %cst_53 = arith.constant dense<0.000000e+00> : vector<2x96xf32>
      %57 = tpu.matmul %arg20, %22, %cst_53 {dimension_numbers = #tpu.dot_dimension_numbers<[1], [0], [0], [1], [0, 0, 1, 1], [], []>} : vector<2x32xf32>, vector<32x96xf32>, vector<2x96xf32> -> vector<2x96xf32>
      %cst_54 = arith.constant dense<0.000000e+00> : vector<2x96xf32>
      %58 = tpu.matmul %arg21, %23, %cst_54 {dimension_numbers = #tpu.dot_dimension_numbers<[1], [0], [0], [1], [0, 0, 1, 1], [], []>} : vector<2x32xf32>, vector<32x96xf32>, vector<2x96xf32> -> vector<2x96xf32>
      %59 = vector.extract_strided_slice %52 {offsets = [0, 0], sizes = [2, 32], strides = [1, 1]} : vector<2x96xf32> to vector<2x32xf32>
      %60 = vector.extract_strided_slice %57 {offsets = [0, 0], sizes = [2, 32], strides = [1, 1]} : vector<2x96xf32> to vector<2x32xf32>
      %61 = arith.addf %59, %60 : vector<2x32xf32>
      %62 = arith.negf %61 : vector<2x32xf32>
      %63 = math.exp %62 : vector<2x32xf32>
      %cst_55 = arith.constant 1.000000e+00 : f32
      %64 = vector.broadcast %cst_55 : f32 to vector<2x32xf32>
      %65 = arith.addf %64, %63 : vector<2x32xf32>
      %66 = arith.divf %64, %65 : vector<2x32xf32>
      %67 = vector.extract_strided_slice %52 {offsets = [0, 32], sizes = [2, 32], strides = [1, 1]} : vector<2x96xf32> to vector<2x32xf32>
      %68 = vector.extract_strided_slice %57 {offsets = [0, 32], sizes = [2, 32], strides = [1, 1]} : vector<2x96xf32> to vector<2x32xf32>
      %69 = arith.addf %67, %68 : vector<2x32xf32>
      %70 = arith.negf %69 : vector<2x32xf32>
      %71 = math.exp %70 : vector<2x32xf32>
      %cst_56 = arith.constant 1.000000e+00 : f32
      %72 = vector.broadcast %cst_56 : f32 to vector<2x32xf32>
      %73 = arith.addf %72, %71 : vector<2x32xf32>
      %74 = arith.divf %72, %73 : vector<2x32xf32>
      %75 = vector.extract_strided_slice %52 {offsets = [0, 64], sizes = [2, 32], strides = [1, 1]} : vector<2x96xf32> to vector<2x32xf32>
      %76 = vector.extract_strided_slice %57 {offsets = [0, 64], sizes = [2, 32], strides = [1, 1]} : vector<2x96xf32> to vector<2x32xf32>
      %77 = arith.addf %76, %26 : vector<2x32xf32>
      %78 = arith.mulf %66, %77 : vector<2x32xf32>
      %79 = arith.addf %75, %78 : vector<2x32xf32>
      %80 = math.tanh %79 : vector<2x32xf32>
      %cst_57 = arith.constant 1.000000e+00 : f32
      %81 = vector.broadcast %cst_57 : f32 to vector<2x32xf32>
      %82 = arith.subf %81, %74 : vector<2x32xf32>
      %83 = arith.mulf %82, %80 : vector<2x32xf32>
      %84 = arith.mulf %74, %arg20 : vector<2x32xf32>
      %85 = arith.addf %83, %84 : vector<2x32xf32>
      %86 = vector.extract_strided_slice %56 {offsets = [0, 0], sizes = [2, 32], strides = [1, 1]} : vector<2x96xf32> to vector<2x32xf32>
      %87 = vector.extract_strided_slice %58 {offsets = [0, 0], sizes = [2, 32], strides = [1, 1]} : vector<2x96xf32> to vector<2x32xf32>
      %88 = arith.addf %86, %87 : vector<2x32xf32>
      %89 = arith.negf %88 : vector<2x32xf32>
      %90 = math.exp %89 : vector<2x32xf32>
      %cst_58 = arith.constant 1.000000e+00 : f32
      %91 = vector.broadcast %cst_58 : f32 to vector<2x32xf32>
      %92 = arith.addf %91, %90 : vector<2x32xf32>
      %93 = arith.divf %91, %92 : vector<2x32xf32>
      %94 = vector.extract_strided_slice %56 {offsets = [0, 32], sizes = [2, 32], strides = [1, 1]} : vector<2x96xf32> to vector<2x32xf32>
      %95 = vector.extract_strided_slice %58 {offsets = [0, 32], sizes = [2, 32], strides = [1, 1]} : vector<2x96xf32> to vector<2x32xf32>
      %96 = arith.addf %94, %95 : vector<2x32xf32>
      %97 = arith.negf %96 : vector<2x32xf32>
      %98 = math.exp %97 : vector<2x32xf32>
      %cst_59 = arith.constant 1.000000e+00 : f32
      %99 = vector.broadcast %cst_59 : f32 to vector<2x32xf32>
      %100 = arith.addf %99, %98 : vector<2x32xf32>
      %101 = arith.divf %99, %100 : vector<2x32xf32>
      %102 = vector.extract_strided_slice %56 {offsets = [0, 64], sizes = [2, 32], strides = [1, 1]} : vector<2x96xf32> to vector<2x32xf32>
      %103 = vector.extract_strided_slice %58 {offsets = [0, 64], sizes = [2, 32], strides = [1, 1]} : vector<2x96xf32> to vector<2x32xf32>
      %104 = arith.addf %103, %29 : vector<2x32xf32>
      %105 = arith.mulf %93, %104 : vector<2x32xf32>
      %106 = arith.addf %102, %105 : vector<2x32xf32>
      %107 = math.tanh %106 : vector<2x32xf32>
      %cst_60 = arith.constant 1.000000e+00 : f32
      %108 = vector.broadcast %cst_60 : f32 to vector<2x32xf32>
      %109 = arith.subf %108, %101 : vector<2x32xf32>
      %110 = arith.mulf %109, %107 : vector<2x32xf32>
      %111 = arith.mulf %101, %arg21 : vector<2x32xf32>
      %112 = arith.addf %110, %111 : vector<2x32xf32>
      %113 = arith.maximumf %arg22, %85 : vector<2x32xf32>
      %114 = arith.maximumf %arg23, %112 : vector<2x32xf32>
      scf.yield %85, %112, %113, %114 : vector<2x32xf32>, vector<2x32xf32>, vector<2x32xf32>, vector<2x32xf32>
    }
    %c8_i32_32 = arith.constant 8 : i32
    %c0_33 = arith.constant 0 : index
    %c0_34 = arith.constant 0 : index
    %34 = vector.load %arg11[%c0_33, %c0_34] : memref<32x64xf32, #tpu.memory_space<vmem>>, vector<32x64xf32>
    %cst_35 = arith.constant dense<0.000000e+00> : vector<2x64xf32>
    %35 = tpu.matmul %33#2, %34, %cst_35 {dimension_numbers = #tpu.dot_dimension_numbers<[1], [0], [0], [1], [0, 0, 1, 1], [], []>} : vector<2x32xf32>, vector<32x64xf32>, vector<2x64xf32> -> vector<2x64xf32>
    %c0_36 = arith.constant 0 : index
    %c0_37 = arith.constant 0 : index
    %36 = vector.load %arg12[%c0_36, %c0_37] : memref<32x64xf32, #tpu.memory_space<vmem>>, vector<32x64xf32>
    %cst_38 = arith.constant dense<0.000000e+00> : vector<2x64xf32>
    %37 = tpu.matmul %33#3, %36, %cst_38 {dimension_numbers = #tpu.dot_dimension_numbers<[1], [0], [0], [1], [0, 0, 1, 1], [], []>} : vector<2x32xf32>, vector<32x64xf32>, vector<2x64xf32> -> vector<2x64xf32>
    %38 = arith.addf %35, %37 : vector<2x64xf32>
    %c0_39 = arith.constant 0 : index
    %c0_40 = arith.constant 0 : index
    %39 = vector.load %arg13[%c0_39, %c0_40] : memref<1x64xf32, #tpu.memory_space<vmem>>, vector<1x64xf32>
    %40 = vector.broadcast %39 : vector<1x64xf32> to vector<2x64xf32>
    %41 = arith.addf %38, %40 : vector<2x64xf32>
    %cst_41 = arith.constant 0.000000e+00 : f32
    %42 = vector.broadcast %cst_41 : f32 to vector<2x64xf32>
    %43 = arith.maximumf %41, %42 : vector<2x64xf32>
    %c0_42 = arith.constant 0 : index
    %c0_43 = arith.constant 0 : index
    %44 = vector.load %arg14[%c0_42, %c0_43] : memref<64x1xf32, #tpu.memory_space<vmem>>, vector<64x1xf32>
    %cst_44 = arith.constant dense<0.000000e+00> : vector<2x1xf32>
    %45 = tpu.matmul %43, %44, %cst_44 {dimension_numbers = #tpu.dot_dimension_numbers<[1], [0], [0], [1], [0, 0, 1, 1], [], []>} : vector<2x64xf32>, vector<64x1xf32>, vector<2x1xf32> -> vector<2x1xf32>
    %c0_45 = arith.constant 0 : index
    %c0_46 = arith.constant 0 : index
    %46 = vector.load %arg15[%c0_45, %c0_46] : memref<1x1xf32, #tpu.memory_space<vmem>>, vector<1x1xf32>
    %47 = vector.broadcast %46 : vector<1x1xf32> to vector<2x1xf32>
    %48 = arith.addf %45, %47 : vector<2x1xf32>
    %c0_47 = arith.constant 0 : index
    %c0_48 = arith.constant 0 : index
    %49 = vector.load %arg16[%c0_47, %c0_48] : memref<2x1xf32, #tpu.memory_space<vmem>>, vector<2x1xf32>
    tpu.vector_store %arg16[%c0_47, %c0_48], %48 {strides = array<i32>} : memref<2x1xf32, #tpu.memory_space<vmem>>, vector<2x1xf32>,
    return
  }
}

</mosaic_0001>

<llo_original>
// kernel: tpu_custom_call.1
$region0: #{tpu_custom_call.1}
  #allocation0 [shape = 'u32[]', space=smem, size = 0x4, offset = 0x4, fixed_abs, tag = 'smem constant byte address 0x4 - core index']
  #allocation1 [shape = 'u32[144,128]{1,0:T(1,128)}', space=vmem, size = 0x12000, scoped, tag = 'internal scratch']
  #allocation2 [shape = 'f32[8,2,96]{2,1,0:T(2,128)}', space=vmem, size = 0x2000, scoped, tag = 'scratch operand']
  #allocation3 [shape = 'f32[8,2,96]{2,1,0:T(2,128)}', space=vmem, size = 0x2000, scoped, tag = 'scratch operand']
  #allocation4 [shape = 'f32[1,1]{1,0:T(1,128)S(1)}', space=vmem, size = 0x200, scoped, tag = 'scoped memory for tpu_custom_call.1']
  %s0 = inlined_call_operand.hbm [shape: f32[16,64], index: 0, kind: input, shape index: {}]
  %s1 = inlined_call_operand.vmem [shape: f32[64,32], index: 1, kind: input, shape index: {}]
  %s2 = inlined_call_operand.vmem [shape: f32[1,32], index: 2, kind: input, shape index: {}]
  %s3 = inlined_call_operand.vmem [shape: f32[32,96], index: 3, kind: input, shape index: {}]
  %s4 = inlined_call_operand.vmem [shape: f32[32,96], index: 4, kind: input, shape index: {}]
  %s5 = inlined_call_operand.vmem [shape: f32[1,96], index: 5, kind: input, shape index: {}]
  %s6 = inlined_call_operand.hbm [shape: f32[1,32], index: 6, kind: input, shape index: {}]
  %s7 = inlined_call_operand.vmem [shape: f32[32,96], index: 7, kind: input, shape index: {}]
  %s8 = inlined_call_operand.vmem [shape: f32[32,96], index: 8, kind: input, shape index: {}]
  %s9 = inlined_call_operand.vmem [shape: f32[1,96], index: 9, kind: input, shape index: {}]
  %s10 = inlined_call_operand.vmem [shape: f32[1,32], index: 10, kind: input, shape index: {}]
  %s11 = inlined_call_operand.vmem [shape: f32[32,64], index: 11, kind: input, shape index: {}]
  %s12 = inlined_call_operand.vmem [shape: f32[32,64], index: 12, kind: input, shape index: {}]
  %s13 = inlined_call_operand.vmem [shape: f32[1,64], index: 13, kind: input, shape index: {}]
  %s14 = inlined_call_operand.vmem [shape: f32[64,1], index: 14, kind: input, shape index: {}]
  %s15 = inlined_call_operand.<no memory space> [shape: f32[1,1], index: 15, kind: input, shape index: {}]
  %s16 = inlined_call_operand.vmem [shape: f32[2,1], index: 16, kind: output, shape index: {}]
  %s17 = sld [smem:[#allocation0]]
  $region89: #{tpu_custom_call.1} parent=0
    _
  %s19 = ssub.s32 1, %s17
  %s20 = scalar_select 0, %s19, %s17
  %v21 = vstv %s15
  %22 = vst [vmem:[#allocation4] sm:$0x1] %v21
  $region1: #{tpu_custom_call.1} parent=0
    #allocation5 [shape = 'u8[8192]{0}', space=vmem, size = 0x2000, scoped, tag = 'input window, operand 0, single buffered']
    #allocation6 [shape = 's32[1]{0}', space=sflag, size = 0x4, scoped, tag = 'scoped memory for tpu_custom_call.1']
    #allocation7 [shape = 'u8[512]{0}', space=vmem, size = 0x400, scoped, tag = 'input window, operand 6, single buffered']
    #allocation8 [shape = 's32[1]{0}', space=sflag, size = 0x4, scoped, tag = 'scoped memory for tpu_custom_call.1']
    %23 = vsyncpa [#allocation6], 0
    %24 = vsyncpa [#allocation8], 0
    // Predicated region
    $region2: #{tpu_custom_call.1} parent=1 // pred_check
      _
    $region3: #{tpu_custom_call.1} parent=1 // pred_check_branch
      %26 = sbr.rel (0) target = $region5
    $region4: #{tpu_custom_call.1} parent=1 // pred_region
      %s28 = ssub.s32 256, 256
      %29 = vsyncadd [#allocation6], %s28
      %s30 = sshll.u32 [#allocation5], 4
      %s31 = int_to_ptr.vmem [resolvable:$true] %s30
      %36 = dma.hbm_to_vmem [thread:$0]  %s0, 256, %s31, [#allocation6], 128, 128, 8
    $region5: #{tpu_custom_call.1} parent=1 // pred_fallthru
      _
    // Predicated region
    $region6: #{tpu_custom_call.1} parent=1 // pred_check
      _
    $region7: #{tpu_custom_call.1} parent=1 // pred_check_branch
      %38 = sbr.rel (0) target = $region9
    $region8: #{tpu_custom_call.1} parent=1 // pred_region
      _
    $region9: #{tpu_custom_call.1} parent=1 // pred_fallthru
      _
    // Predicated region
    $region10: #{tpu_custom_call.1} parent=1 // pred_check
      _
    $region11: #{tpu_custom_call.1} parent=1 // pred_check_branch
      %40 = sbr.rel (0) target = $region13
    $region12: #{tpu_custom_call.1} parent=1 // pred_region
      _
    $region13: #{tpu_custom_call.1} parent=1 // pred_fallthru
      _
    // Predicated region
    $region14: #{tpu_custom_call.1} parent=1 // pred_check
      _
    $region15: #{tpu_custom_call.1} parent=1 // pred_check_branch
      %42 = sbr.rel (0) target = $region17
    $region16: #{tpu_custom_call.1} parent=1 // pred_region
      _
    $region17: #{tpu_custom_call.1} parent=1 // pred_fallthru
      _
    // Predicated region
    $region18: #{tpu_custom_call.1} parent=1 // pred_check
      _
    $region19: #{tpu_custom_call.1} parent=1 // pred_check_branch
      %44 = sbr.rel (0) target = $region21
    $region20: #{tpu_custom_call.1} parent=1 // pred_region
      _
    $region21: #{tpu_custom_call.1} parent=1 // pred_fallthru
      _
    // Predicated region
    $region22: #{tpu_custom_call.1} parent=1 // pred_check
      _
    $region23: #{tpu_custom_call.1} parent=1 // pred_check_branch
      %46 = sbr.rel (0) target = $region25
    $region24: #{tpu_custom_call.1} parent=1 // pred_region
      _
    $region25: #{tpu_custom_call.1} parent=1 // pred_fallthru
      _
    // Predicated region
    $region26: #{tpu_custom_call.1} parent=1 // pred_check
      _
    $region27: #{tpu_custom_call.1} parent=1 // pred_check_branch
      %48 = sbr.rel (0) target = $region29
    $region28: #{tpu_custom_call.1} parent=1 // pred_region
      %s50 = ssub.s32 16, 16
      %51 = vsyncadd [#allocation8], %s50
      %s53 = sshll.u32 [#allocation7], 4
      %s54 = int_to_ptr.vmem [resolvable:$true] %s53
      %56 = dma.hbm_to_vmem [thread:$0]  %s6, 16, %s54, [#allocation8]
    $region29: #{tpu_custom_call.1} parent=1 // pred_fallthru
      _
    // Predicated region
    $region30: #{tpu_custom_call.1} parent=1 // pred_check
      _
    $region31: #{tpu_custom_call.1} parent=1 // pred_check_branch
      %58 = sbr.rel (0) target = $region33
    $region32: #{tpu_custom_call.1} parent=1 // pred_region
      _
    $region33: #{tpu_custom_call.1} parent=1 // pred_fallthru
      _
    // Predicated region
    $region34: #{tpu_custom_call.1} parent=1 // pred_check
      _
    $region35: #{tpu_custom_call.1} parent=1 // pred_check_branch
      %60 = sbr.rel (0) target = $region37
    $region36: #{tpu_custom_call.1} parent=1 // pred_region
      _
    $region37: #{tpu_custom_call.1} parent=1 // pred_fallthru
      _
    // Predicated region
    $region38: #{tpu_custom_call.1} parent=1 // pred_check
      _
    $region39: #{tpu_custom_call.1} parent=1 // pred_check_branch
      %62 = sbr.rel (0) target = $region41
    $region40: #{tpu_custom_call.1} parent=1 // pred_region
      _
    $region41: #{tpu_custom_call.1} parent=1 // pred_fallthru
      _
    // Predicated region
    $region42: #{tpu_custom_call.1} parent=1 // pred_check
      _
    $region43: #{tpu_custom_call.1} parent=1 // pred_check_branch
      %64 = sbr.rel (0) target = $region45
    $region44: #{tpu_custom_call.1} parent=1 // pred_region
      _
    $region45: #{tpu_custom_call.1} parent=1 // pred_fallthru
      _
    // Predicated region
    $region46: #{tpu_custom_call.1} parent=1 // pred_check
      _
    $region47: #{tpu_custom_call.1} parent=1 // pred_check_branch
      %66 = sbr.rel (0) target = $region49
    $region48: #{tpu_custom_call.1} parent=1 // pred_region
      _
    $region49: #{tpu_custom_call.1} parent=1 // pred_fallthru
      _
    // Predicated region
    $region50: #{tpu_custom_call.1} parent=1 // pred_check
      _
    $region51: #{tpu_custom_call.1} parent=1 // pred_check_branch
      %68 = sbr.rel (0) target = $region53
    $region52: #{tpu_custom_call.1} parent=1 // pred_region
      _
    $region53: #{tpu_custom_call.1} parent=1 // pred_fallthru
      _
    // Predicated region
    $region54: #{tpu_custom_call.1} parent=1 // pred_check
      _
    $region55: #{tpu_custom_call.1} parent=1 // pred_check_branch
      %70 = sbr.rel (0) target = $region57
    $region56: #{tpu_custom_call.1} parent=1 // pred_region
      _
    $region57: #{tpu_custom_call.1} parent=1 // pred_fallthru
      _
    // Predicated region
    $region58: #{tpu_custom_call.1} parent=1 // pred_check
      _
    $region59: #{tpu_custom_call.1} parent=1 // pred_check_branch
      %72 = sbr.rel (0) target = $region61
    $region60: #{tpu_custom_call.1} parent=1 // pred_region
      _
    $region61: #{tpu_custom_call.1} parent=1 // pred_fallthru
      _
    // Predicated region
    $region62: #{tpu_custom_call.1} parent=1 // pred_check
      _
    $region63: #{tpu_custom_call.1} parent=1 // pred_check_branch
      %74 = sbr.rel (0) target = $region65
    $region64: #{tpu_custom_call.1} parent=1 // pred_region
      _
    $region65: #{tpu_custom_call.1} parent=1 // pred_fallthru
      _
    // Predicated region
    $region66: #{tpu_custom_call.1} parent=1 // pred_check
      _
    $region67: #{tpu_custom_call.1} parent=1 // pred_check_branch
      %76 = sbr.rel (0) target = $region69
    $region68: #{tpu_custom_call.1} parent=1 // pred_region
      %77 = dma.done [#allocation6], 256
    $region69: #{tpu_custom_call.1} parent=1 // pred_fallthru
      _
    // Predicated region
    $region70: #{tpu_custom_call.1} parent=1 // pred_check
      _
    $region71: #{tpu_custom_call.1} parent=1 // pred_check_branch
      %79 = sbr.rel (0) target = $region73
    $region72: #{tpu_custom_call.1} parent=1 // pred_region
      %80 = dma.done [#allocation8], 16
    $region73: #{tpu_custom_call.1} parent=1 // pred_fallthru
      _
    %v81 = vld [vmem:[#allocation5] sm:$0xff]
    %v82 = vld [vmem:[#allocation5 + $0x8] sm:$0xff]
    %v83 = vld [vmem:[%s1] sm:$0xff]
    %v84 = vld [vmem:[%s1 + $0x8] sm:$0xff]
    %v85 = vld [vmem:[%s1 + $0x10] sm:$0xff]
    %v86 = vld [vmem:[%s1 + $0x18] sm:$0xff]
    %v87 = vld [vmem:[%s1 + $0x20] sm:$0xff]
    %v88 = vld [vmem:[%s1 + $0x28] sm:$0xff]
    %v89 = vld [vmem:[%s1 + $0x30] sm:$0xff]
    %v90 = vld [vmem:[%s1 + $0x38] sm:$0xff]
    %v91 = vld [vmem:[%s2] sm:$0x1]
    %v93 = vlaneseq
    %v94 = vshrl.u32 %v93, 7
    %v95 = vsub.s32 0, %v94
    %v96 = vrot.slane %v91, %v95
    %vm98 = vcmask 523264
    %v100 = vsel %vm98, %v81, 0
    %v103 = vsel %vm98, %v82, 0
    %105 = vmatprep.subr.mxu0 0.0
    %106 = vmatpush1.msra.mxu0 %v83
    %107 = vmatprep.subr.mxu0 0.0
    %108 = vmatpush1.msra.mxu0 %v84
    %109 = vmatprep.subr.mxu0 0.0
    %110 = vmatpush1.msra.mxu0 %v85
    %111 = vmatprep.subr.mxu0 0.0
    %112 = vmatpush1.msra.mxu0 %v86
    %113 = vmatprep.subr.mxu0 0.0
    %114 = vmatpush1.msra.mxu0 %v87
    %115 = vmatprep.subr.mxu0 0.0
    %116 = vmatpush1.msra.mxu0 %v88
    %117 = vmatprep.subr.mxu0 0.0
    %118 = vmatpush1.msra.mxu0 %v89
    %119 = vmatprep.subr.mxu0 0.0
    %120 = vmatpush1.msra.mxu0 %v90
    %121 = vmatprep.subr.mxu0 0.0
    %122 = vmatpush1.msra.mxu0 0.0
    %123 = vmatprep.subr.mxu0 0.0
    %124 = vmatpush1.msra.mxu0 0.0
    %125 = vmatprep.subr.mxu0 0.0
    %126 = vmatpush1.msra.mxu0 0.0
    %127 = vmatprep.subr.mxu0 0.0
    %128 = vmatpush1.msra.mxu0 0.0
    %129 = vmatprep.subr.mxu0 0.0
    %130 = vmatpush1.msra.mxu0 0.0
    %131 = vmatprep.subr.mxu0 0.0
    %132 = vmatpush1.msra.mxu0 0.0
    %133 = vmatprep.subr.mxu0 0.0
    %134 = vmatpush1.msra.mxu0 0.0
    %135 = vmatprep.subr.mxu0 0.0
    %136 = vmatpush1.msra.mxu0 0.0
    %137 = vmatprep.subr.mxu0 0.0
    %138 = vmatpush1.msra.mxu0 0.0
    %139 = vmatprep.subr.mxu0 0.0
    %140 = vmatpush1.msra.mxu0 0.0
    %141 = vmatprep.subr.mxu0 0.0
    %142 = vmatpush1.msra.mxu0 0.0
    %143 = vmatprep.subr.mxu0 0.0
    %144 = vmatpush1.msra.mxu0 0.0
    %145 = vmatprep.subr.mxu0 0.0
    %146 = vmatpush1.msra.mxu0 0.0
    %147 = vmatprep.subr.mxu0 0.0
    %148 = vmatpush1.msra.mxu0 0.0
    %149 = vmatprep.subr.mxu0 0.0
    %150 = vmatpush1.msra.mxu0 0.0
    %151 = vmatprep.subr.mxu0 0.0
    %152 = vmatpush1.msra.mxu0 0.0
    %153 = vmatprep.subr.mxu0 0.0
    %154 = vmatpush1.msra.mxu0 0.0
    %155 = vmatprep.subr.mxu0 0.0
    %156 = vmatpush1.msra.mxu0 0.0
    %157 = vmatprep.subr.mxu0 0.0
    %158 = vmatpush1.msra.mxu0 0.0
    %159 = vmatprep.subr.mxu0 0.0
    %160 = vmatpush1.msra.mxu0 0.0
    %161 = vmatprep.subr.mxu0 0.0
    %162 = vmatpush1.msra.mxu0 0.0
    %163 = vmatprep.subr.mxu0 0.0
    %164 = vmatpush1.msra.mxu0 0.0
    %165 = vmatprep.subr.mxu0 0.0
    %166 = vmatpush1.msra.mxu0 0.0
    %167 = vmatprep.subr.mxu0 0.0
    %168 = vmatpush1.msra.mxu0 0.0
    %169 = vmatprep.mubr.f32.mxu0 0.0
    %170 = vmatmul.mubr.f32.gmra.mrb[0].mxu0 %v100
    %v171 = vpop.f32.mrb[0].mxu0
    %v172 = vadd.f32 %v96, %v171
    %v173 = vpop.f32.mrb[0].mxu0
    %174 = vmatprep.mubr.f32.mxu0 0.0
    %175 = vmatmul.mubr.f32.gmra.mrb[0].mxu0 %v103
    %v176 = vpop.f32.mrb[0].mxu0
    %v177 = vadd.f32 %v96, %v176
    %v178 = vpop.f32.mrb[0].mxu0
    %179 = vdwg.mxu0
    %v180 = vmax.f32 %v172, 0.0
    %v181 = vmax.f32 %v177, 0.0
    %v182 = vld [vmem:[%s3] sm:$0xff]
    %v183 = vld [vmem:[%s3 + $0x8] sm:$0xff]
    %v184 = vld [vmem:[%s3 + $0x10] sm:$0xff]
    %v185 = vld [vmem:[%s3 + $0x18] sm:$0xff]
    %v186 = vld [vmem:[%s5] sm:$0x1]
    %v188 = vlaneseq
    %v189 = vshrl.u32 %v188, 7
    %v190 = vsub.s32 0, %v189
    %v191 = vrot.slane %v186, %v190
    %vm193 = vcmask 261120
    %v195 = vsel %vm193, %v180, 0
    %v198 = vsel %vm193, %v181, 0
    %200 = vmatprep.subr.mxu0 0.0
    %201 = vmatpush1.msra.mxu0 %v182
    %202 = vmatprep.subr.mxu0 0.0
    %203 = vmatpush1.msra.mxu0 %v183
    %204 = vmatprep.subr.mxu0 0.0
    %205 = vmatpush1.msra.mxu0 %v184
    %206 = vmatprep.subr.mxu0 0.0
    %207 = vmatpush1.msra.mxu0 %v185
    %208 = vmatprep.subr.mxu0 0.0
    %209 = vmatpush1.msra.mxu0 0.0
    %210 = vmatprep.subr.mxu0 0.0
    %211 = vmatpush1.msra.mxu0 0.0
    %212 = vmatprep.subr.mxu0 0.0
    %213 = vmatpush1.msra.mxu0 0.0
    %214 = vmatprep.subr.mxu0 0.0
    %215 = vmatpush1.msra.mxu0 0.0
    %216 = vmatprep.subr.mxu0 0.0
    %217 = vmatpush1.msra.mxu0 0.0
    %218 = vmatprep.subr.mxu0 0.0
    %219 = vmatpush1.msra.mxu0 0.0
    %220 = vmatprep.subr.mxu0 0.0
    %221 = vmatpush1.msra.mxu0 0.0
    %222 = vmatprep.subr.mxu0 0.0
    %223 = vmatpush1.msra.mxu0 0.0
    %224 = vmatprep.subr.mxu0 0.0
    %225 = vmatpush1.msra.mxu0 0.0
    %226 = vmatprep.subr.mxu0 0.0
    %227 = vmatpush1.msra.mxu0 0.0
    %228 = vmatprep.subr.mxu0 0.0
    %229 = vmatpush1.msra.mxu0 0.0
    %230 = vmatprep.subr.mxu0 0.0
    %231 = vmatpush1.msra.mxu0 0.0
    %232 = vmatprep.subr.mxu0 0.0
    %233 = vmatpush1.msra.mxu0 0.0
    %234 = vmatprep.subr.mxu0 0.0
    %235 = vmatpush1.msra.mxu0 0.0
    %236 = vmatprep.subr.mxu0 0.0
    %237 = vmatpush1.msra.mxu0 0.0
    %238 = vmatprep.subr.mxu0 0.0
    %239 = vmatpush1.msra.mxu0 0.0
    %240 = vmatprep.subr.mxu0 0.0
    %241 = vmatpush1.msra.mxu0 0.0
    %242 = vmatprep.subr.mxu0 0.0
    %243 = vmatpush1.msra.mxu0 0.0
    %244 = vmatprep.subr.mxu0 0.0
    %245 = vmatpush1.msra.mxu0 0.0
    %246 = vmatprep.subr.mxu0 0.0
    %247 = vmatpush1.msra.mxu0 0.0
    %248 = vmatprep.subr.mxu0 0.0
    %249 = vmatpush1.msra.mxu0 0.0
    %250 = vmatprep.subr.mxu0 0.0
    %251 = vmatpush1.msra.mxu0 0.0
    %252 = vmatprep.subr.mxu0 0.0
    %253 = vmatpush1.msra.mxu0 0.0
    %254 = vmatprep.subr.mxu0 0.0
    %255 = vmatpush1.msra.mxu0 0.0
    %256 = vmatprep.subr.mxu0 0.0
    %257 = vmatpush1.msra.mxu0 0.0
    %258 = vmatprep.subr.mxu0 0.0
    %259 = vmatpush1.msra.mxu0 0.0
    %260 = vmatprep.subr.mxu0 0.0
    %261 = vmatpush1.msra.mxu0 0.0
    %262 = vmatprep.subr.mxu0 0.0
    %263 = vmatpush1.msra.mxu0 0.0
    %264 = vmatprep.mubr.f32.mxu0 0.0
    %265 = vmatmul.mubr.f32.gmra.mrb[0].mxu0 %v195
    %v266 = vpop.f32.mrb[0].mxu0
    %v267 = vadd.f32 %v191, %v266
    %v268 = vpop.f32.mrb[0].mxu0
    %269 = vmatprep.mubr.f32.mxu0 0.0
    %270 = vmatmul.mubr.f32.gmra.mrb[0].mxu0 %v198
    %v271 = vpop.f32.mrb[0].mxu0
    %v272 = vadd.f32 %v191, %v271
    %v273 = vpop.f32.mrb[0].mxu0
    %274 = vdwg.mxu0
    %v277 = vcombine.high %v267, %v267
    %v279 = vunpack.c.l.s4 1983009808
    %v280 = vunpack.c.0.s8 %v279
    %v281 = vlaneseq
    %v282 = vshrl.u32 %v281, 7
    %v283 = vsub.s32 %v280, %v282
    %v284 = vrot.slane %v267, %v283
    %v286 = vunpack.c.l.s4 1983009808
    %v287 = vunpack.c.0.s8 %v286
    %v288 = vlaneseq
    %v289 = vshrl.u32 %v288, 7
    %v290 = vsub.s32 %v287, %v289
    %v291 = vrot.slane %v277, %v290
    %v292 = vcombine.high %v284, %v284
    %v293 = vcombine.high %v291, %v291
    %v294 = vcombine.high %v272, %v272
    %v296 = vunpack.c.l.s4 1983009808
    %v297 = vunpack.c.0.s8 %v296
    %v298 = vlaneseq
    %v299 = vshrl.u32 %v298, 7
    %v300 = vsub.s32 %v297, %v299
    %v301 = vrot.slane %v272, %v300
    %v303 = vunpack.c.l.s4 1983009808
    %v304 = vunpack.c.0.s8 %v303
    %v305 = vlaneseq
    %v306 = vshrl.u32 %v305, 7
    %v307 = vsub.s32 %v304, %v306
    %v308 = vrot.slane %v294, %v307
    %v309 = vcombine.high %v301, %v301
    %v310 = vcombine.high %v308, %v308
    %vm319 = vcmask 779264
    %320 = vst.msk [vmem:[#allocation2] sm:$0x3] %vm319, %v284
    %321 = vst.msk [vmem:[#allocation2 + $0x2] sm:$0x3] %vm319, %v292
    %322 = vst.msk [vmem:[#allocation2 + $0x4] sm:$0x3] %vm319, %v291
    %323 = vst.msk [vmem:[#allocation2 + $0x6] sm:$0x3] %vm319, %v293
    %324 = vst.msk [vmem:[#allocation2 + $0x8] sm:$0x3] %vm319, %v301
    %325 = vst.msk [vmem:[#allocation2 + $0xa] sm:$0x3] %vm319, %v309
    %326 = vst.msk [vmem:[#allocation2 + $0xc] sm:$0x3] %vm319, %v308
    %327 = vst.msk [vmem:[#allocation2 + $0xe] sm:$0x3] %vm319, %v310
    %v328 = vld [vmem:[%s7] sm:$0xff]
    %v329 = vld [vmem:[%s7 + $0x8] sm:$0xff]
    %v330 = vld [vmem:[%s7 + $0x10] sm:$0xff]
    %v331 = vld [vmem:[%s7 + $0x18] sm:$0xff]
    %v332 = vld [vmem:[%s9] sm:$0x1]
    %v334 = vlaneseq
    %v335 = vshrl.u32 %v334, 7
    %v336 = vsub.s32 0, %v335
    %v337 = vrot.slane %v332, %v336
    %339 = vmatprep.subr.mxu0 0.0
    %340 = vmatpush1.msra.mxu0 %v328
    %341 = vmatprep.subr.mxu0 0.0
    %342 = vmatpush1.msra.mxu0 %v329
    %343 = vmatprep.subr.mxu0 0.0
    %344 = vmatpush1.msra.mxu0 %v330
    %345 = vmatprep.subr.mxu0 0.0
    %346 = vmatpush1.msra.mxu0 %v331
    %347 = vmatprep.subr.mxu0 0.0
    %348 = vmatpush1.msra.mxu0 0.0
    %349 = vmatprep.subr.mxu0 0.0
    %350 = vmatpush1.msra.mxu0 0.0
    %351 = vmatprep.subr.mxu0 0.0
    %352 = vmatpush1.msra.mxu0 0.0
    %353 = vmatprep.subr.mxu0 0.0
    %354 = vmatpush1.msra.mxu0 0.0
    %355 = vmatprep.subr.mxu0 0.0
    %356 = vmatpush1.msra.mxu0 0.0
    %357 = vmatprep.subr.mxu0 0.0
    %358 = vmatpush1.msra.mxu0 0.0
    %359 = vmatprep.subr.mxu0 0.0
    %360 = vmatpush1.msra.mxu0 0.0
    %361 = vmatprep.subr.mxu0 0.0
    %362 = vmatpush1.msra.mxu0 0.0
    %363 = vmatprep.subr.mxu0 0.0
    %364 = vmatpush1.msra.mxu0 0.0
    %365 = vmatprep.subr.mxu0 0.0
    %366 = vmatpush1.msra.mxu0 0.0
    %367 = vmatprep.subr.mxu0 0.0
    %368 = vmatpush1.msra.mxu0 0.0
    %369 = vmatprep.subr.mxu0 0.0
    %370 = vmatpush1.msra.mxu0 0.0
    %371 = vmatprep.subr.mxu0 0.0
    %372 = vmatpush1.msra.mxu0 0.0
    %373 = vmatprep.subr.mxu0 0.0
    %374 = vmatpush1.msra.mxu0 0.0
    %375 = vmatprep.subr.mxu0 0.0
    %376 = vmatpush1.msra.mxu0 0.0
    %377 = vmatprep.subr.mxu0 0.0
    %378 = vmatpush1.msra.mxu0 0.0
    %379 = vmatprep.subr.mxu0 0.0
    %380 = vmatpush1.msra.mxu0 0.0
    %381 = vmatprep.subr.mxu0 0.0
    %382 = vmatpush1.msra.mxu0 0.0
    %383 = vmatprep.subr.mxu0 0.0
    %384 = vmatpush1.msra.mxu0 0.0
    %385 = vmatprep.subr.mxu0 0.0
    %386 = vmatpush1.msra.mxu0 0.0
    %387 = vmatprep.subr.mxu0 0.0
    %388 = vmatpush1.msra.mxu0 0.0
    %389 = vmatprep.subr.mxu0 0.0
    %390 = vmatpush1.msra.mxu0 0.0
    %391 = vmatprep.subr.mxu0 0.0
    %392 = vmatpush1.msra.mxu0 0.0
    %393 = vmatprep.subr.mxu0 0.0
    %394 = vmatpush1.msra.mxu0 0.0
    %395 = vmatprep.subr.mxu0 0.0
    %396 = vmatpush1.msra.mxu0 0.0
    %397 = vmatprep.subr.mxu0 0.0
    %398 = vmatpush1.msra.mxu0 0.0
    %399 = vmatprep.subr.mxu0 0.0
    %400 = vmatpush1.msra.mxu0 0.0
    %401 = vmatprep.subr.mxu0 0.0
    %402 = vmatpush1.msra.mxu0 0.0
    %403 = vmatprep.mubr.f32.mxu0 0.0
    %404 = vmatmul.mubr.f32.gmra.mrb[0].mxu0 %v195
    %v405 = vpop.f32.mrb[0].mxu0
    %v406 = vadd.f32 %v337, %v405
    %v407 = vpop.f32.mrb[0].mxu0
    %408 = vmatprep.mubr.f32.mxu0 0.0
    %409 = vmatmul.mubr.f32.gmra.mrb[0].mxu0 %v198
    %v410 = vpop.f32.mrb[0].mxu0
    %v411 = vadd.f32 %v337, %v410
    %v412 = vpop.f32.mrb[0].mxu0
    %413 = vdwg.mxu0
    %v416 = vcombine.high %v406, %v406
    %v418 = vunpack.c.l.s4 1983009808
    %v419 = vunpack.c.0.s8 %v418
    %v420 = vlaneseq
    %v421 = vshrl.u32 %v420, 7
    %v422 = vsub.s32 %v419, %v421
    %v423 = vrot.slane %v406, %v422
    %v425 = vunpack.c.l.s4 1983009808
    %v426 = vunpack.c.0.s8 %v425
    %v427 = vlaneseq
    %v428 = vshrl.u32 %v427, 7
    %v429 = vsub.s32 %v426, %v428
    %v430 = vrot.slane %v416, %v429
    %v431 = vcombine.high %v423, %v423
    %v432 = vcombine.high %v430, %v430
    %v433 = vcombine.high %v411, %v411
    %v435 = vunpack.c.l.s4 1983009808
    %v436 = vunpack.c.0.s8 %v435
    %v437 = vlaneseq
    %v438 = vshrl.u32 %v437, 7
    %v439 = vsub.s32 %v436, %v438
    %v440 = vrot.slane %v411, %v439
    %v442 = vunpack.c.l.s4 1983009808
    %v443 = vunpack.c.0.s8 %v442
    %v444 = vlaneseq
    %v445 = vshrl.u32 %v444, 7
    %v446 = vsub.s32 %v443, %v445
    %v447 = vrot.slane %v433, %v446
    %v448 = vcombine.high %v440, %v440
    %v449 = vcombine.high %v447, %v447
    %458 = vst.msk [vmem:[#allocation3] sm:$0x3] %vm319, %v423
    %459 = vst.msk [vmem:[#allocation3 + $0x2] sm:$0x3] %vm319, %v431
    %460 = vst.msk [vmem:[#allocation3 + $0x4] sm:$0x3] %vm319, %v430
    %461 = vst.msk [vmem:[#allocation3 + $0x6] sm:$0x3] %vm319, %v432
    %462 = vst.msk [vmem:[#allocation3 + $0x8] sm:$0x3] %vm319, %v440
    %463 = vst.msk [vmem:[#allocation3 + $0xa] sm:$0x3] %vm319, %v448
    %464 = vst.msk [vmem:[#allocation3 + $0xc] sm:$0x3] %vm319, %v447
    %465 = vst.msk [vmem:[#allocation3 + $0xe] sm:$0x3] %vm319, %v449
    %v466 = vld [vmem:[%s4] sm:$0xff]
    %v467 = vld [vmem:[%s4 + $0x8] sm:$0xff]
    %v468 = vld [vmem:[%s4 + $0x10] sm:$0xff]
    %v469 = vld [vmem:[%s4 + $0x18] sm:$0xff]
    %v470 = vld [vmem:[%s8] sm:$0xff]
    %v471 = vld [vmem:[%s8 + $0x8] sm:$0xff]
    %v472 = vld [vmem:[%s8 + $0x10] sm:$0xff]
    %v473 = vld [vmem:[%s8 + $0x18] sm:$0xff]
    %v474 = vld [vmem:[#allocation7] sm:$0x1]
    %v476 = vlaneseq
    %v477 = vshrl.u32 %v476, 7
    %v478 = vsub.s32 0, %v477
    %v479 = vrot.slane %v474, %v478
    %v480 = vld [vmem:[%s10] sm:$0x1]
    %v482 = vlaneseq
    %v483 = vshrl.u32 %v482, 7
    %v484 = vsub.s32 0, %v483
    %v485 = vrot.slane %v480, %v484
    loop: start=0, step=1, limit=8
    $region74: #{tpu_custom_call.1} parent=1 // loop_pre_header
      _
    $region75: #{tpu_custom_call.1} parent=1 // loop_header
      %s487 = sphi 0, %s491
      %p488 = scmp.ge.s32.totalorder %s487, 8
      %v492 = vphi 0.0, %v682
      %v493 = vphi 0.0, %v712
      %v494 = vphi -inf, %v713
      %v495 = vphi -inf, %v714
    $region76: #{tpu_custom_call.1} parent=1 // loop_header_branch
      %490 = sbr.rel (%p488) target = $region80
    $region77: #{tpu_custom_call.1} parent=1 // loop_body
      %s496 = smul.u32 %s487, 2
      %s497 = scalar_lea.vmem [#allocation2], %s496
      %v498 = vld [vmem:[%s497] sm:$0x3]
      %s499 = ssub.s32 7, %s487
      %s500 = smul.u32 %s499, 2
      %s501 = scalar_lea.vmem [#allocation3], %s500
      %v502 = vld [vmem:[%s501] sm:$0x3]
      %504 = vrot.lane.b32.xlu0 %v492, 96
      %v505 = vpop.permute.xlu0 %504
      %v506 = vsel %vm193, %v505, 0
      %508 = vmatprep.subr.mxu0 0.0
      %509 = vmatpush1.msra.mxu0 %v466
      %510 = vmatprep.subr.mxu0 0.0
      %511 = vmatpush1.msra.mxu0 %v467
      %512 = vmatprep.subr.mxu0 0.0
      %513 = vmatpush1.msra.mxu0 %v468
      %514 = vmatprep.subr.mxu0 0.0
      %515 = vmatpush1.msra.mxu0 %v469
      %516 = vmatprep.subr.mxu0 0.0
      %517 = vmatpush1.msra.mxu0 0.0
      %518 = vmatprep.subr.mxu0 0.0
      %519 = vmatpush1.msra.mxu0 0.0
      %520 = vmatprep.subr.mxu0 0.0
      %521 = vmatpush1.msra.mxu0 0.0
      %522 = vmatprep.subr.mxu0 0.0
      %523 = vmatpush1.msra.mxu0 0.0
      %524 = vmatprep.subr.mxu0 0.0
      %525 = vmatpush1.msra.mxu0 0.0
      %526 = vmatprep.subr.mxu0 0.0
      %527 = vmatpush1.msra.mxu0 0.0
      %528 = vmatprep.subr.mxu0 0.0
      %529 = vmatpush1.msra.mxu0 0.0
      %530 = vmatprep.subr.mxu0 0.0
      %531 = vmatpush1.msra.mxu0 0.0
      %532 = vmatprep.subr.mxu0 0.0
      %533 = vmatpush1.msra.mxu0 0.0
      %534 = vmatprep.subr.mxu0 0.0
      %535 = vmatpush1.msra.mxu0 0.0
      %536 = vmatprep.subr.mxu0 0.0
      %537 = vmatpush1.msra.mxu0 0.0
      %538 = vmatprep.subr.mxu0 0.0
      %539 = vmatpush1.msra.mxu0 0.0
      %540 = vmatprep.subr.mxu0 0.0
      %541 = vmatpush1.msra.mxu0 0.0
      %542 = vmatprep.subr.mxu0 0.0
      %543 = vmatpush1.msra.mxu0 0.0
      %544 = vmatprep.subr.mxu0 0.0
      %545 = vmatpush1.msra.mxu0 0.0
      %546 = vmatprep.subr.mxu0 0.0
      %547 = vmatpush1.msra.mxu0 0.0
      %548 = vmatprep.subr.mxu0 0.0
      %549 = vmatpush1.msra.mxu0 0.0
      %550 = vmatprep.subr.mxu0 0.0
      %551 = vmatpush1.msra.mxu0 0.0
      %552 = vmatprep.subr.mxu0 0.0
      %553 = vmatpush1.msra.mxu0 0.0
      %554 = vmatprep.subr.mxu0 0.0
      %555 = vmatpush1.msra.mxu0 0.0
      %556 = vmatprep.subr.mxu0 0.0
      %557 = vmatpush1.msra.mxu0 0.0
      %558 = vmatprep.subr.mxu0 0.0
      %559 = vmatpush1.msra.mxu0 0.0
      %560 = vmatprep.subr.mxu0 0.0
      %561 = vmatpush1.msra.mxu0 0.0
      %562 = vmatprep.subr.mxu0 0.0
      %563 = vmatpush1.msra.mxu0 0.0
      %564 = vmatprep.subr.mxu0 0.0
      %565 = vmatpush1.msra.mxu0 0.0
      %566 = vmatprep.subr.mxu0 0.0
      %567 = vmatpush1.msra.mxu0 0.0
      %568 = vmatprep.subr.mxu0 0.0
      %569 = vmatpush1.msra.mxu0 0.0
      %570 = vmatprep.subr.mxu0 0.0
      %571 = vmatpush1.msra.mxu0 0.0
      %572 = vmatprep.mubr.f32.mxu0 0.0
      %573 = vmatmul.mubr.f32.gmra.mrb[0].mxu0 %v506
      %v574 = vpop.f32.mrb[0].mxu0
      %v575 = vadd.f32 0.0, %v574
      %v576 = vpop.f32.mrb[0].mxu0
      %577 = vdwg.mxu0
      %579 = vrot.lane.b32.xlu0 %v493, 96
      %v580 = vpop.permute.xlu0 %579
      %v581 = vsel %vm193, %v580, 0
      %583 = vmatprep.subr.mxu0 0.0
      %584 = vmatpush1.msra.mxu0 %v470
      %585 = vmatprep.subr.mxu0 0.0
      %586 = vmatpush1.msra.mxu0 %v471
      %587 = vmatprep.subr.mxu0 0.0
      %588 = vmatpush1.msra.mxu0 %v472
      %589 = vmatprep.subr.mxu0 0.0
      %590 = vmatpush1.msra.mxu0 %v473
      %591 = vmatprep.subr.mxu0 0.0
      %592 = vmatpush1.msra.mxu0 0.0
      %593 = vmatprep.subr.mxu0 0.0
      %594 = vmatpush1.msra.mxu0 0.0
      %595 = vmatprep.subr.mxu0 0.0
      %596 = vmatpush1.msra.mxu0 0.0
      %597 = vmatprep.subr.mxu0 0.0
      %598 = vmatpush1.msra.mxu0 0.0
      %599 = vmatprep.subr.mxu0 0.0
      %600 = vmatpush1.msra.mxu0 0.0
      %601 = vmatprep.subr.mxu0 0.0
      %602 = vmatpush1.msra.mxu0 0.0
      %603 = vmatprep.subr.mxu0 0.0
      %604 = vmatpush1.msra.mxu0 0.0
      %605 = vmatprep.subr.mxu0 0.0
      %606 = vmatpush1.msra.mxu0 0.0
      %607 = vmatprep.subr.mxu0 0.0
      %608 = vmatpush1.msra.mxu0 0.0
      %609 = vmatprep.subr.mxu0 0.0
      %610 = vmatpush1.msra.mxu0 0.0
      %611 = vmatprep.subr.mxu0 0.0
      %612 = vmatpush1.msra.mxu0 0.0
      %613 = vmatprep.subr.mxu0 0.0
      %614 = vmatpush1.msra.mxu0 0.0
      %615 = vmatprep.subr.mxu0 0.0
      %616 = vmatpush1.msra.mxu0 0.0
      %617 = vmatprep.subr.mxu0 0.0
      %618 = vmatpush1.msra.mxu0 0.0
      %619 = vmatprep.subr.mxu0 0.0
      %620 = vmatpush1.msra.mxu0 0.0
      %621 = vmatprep.subr.mxu0 0.0
      %622 = vmatpush1.msra.mxu0 0.0
      %623 = vmatprep.subr.mxu0 0.0
      %624 = vmatpush1.msra.mxu0 0.0
      %625 = vmatprep.subr.mxu0 0.0
      %626 = vmatpush1.msra.mxu0 0.0
      %627 = vmatprep.subr.mxu0 0.0
      %628 = vmatpush1.msra.mxu0 0.0
      %629 = vmatprep.subr.mxu0 0.0
      %630 = vmatpush1.msra.mxu0 0.0
      %631 = vmatprep.subr.mxu0 0.0
      %632 = vmatpush1.msra.mxu0 0.0
      %633 = vmatprep.subr.mxu0 0.0
      %634 = vmatpush1.msra.mxu0 0.0
      %635 = vmatprep.subr.mxu0 0.0
      %636 = vmatpush1.msra.mxu0 0.0
      %637 = vmatprep.subr.mxu0 0.0
      %638 = vmatpush1.msra.mxu0 0.0
      %639 = vmatprep.subr.mxu0 0.0
      %640 = vmatpush1.msra.mxu0 0.0
      %641 = vmatprep.subr.mxu0 0.0
      %642 = vmatpush1.msra.mxu0 0.0
      %643 = vmatprep.subr.mxu0 0.0
      %644 = vmatpush1.msra.mxu0 0.0
      %645 = vmatprep.subr.mxu0 0.0
      %646 = vmatpush1.msra.mxu0 0.0
      %647 = vmatprep.mubr.f32.mxu0 0.0
      %648 = vmatmul.mubr.f32.gmra.mrb[0].mxu0 %v581
      %v649 = vpop.f32.mrb[0].mxu0
      %v650 = vadd.f32 0.0, %v649
      %v651 = vpop.f32.mrb[0].mxu0
      %652 = vdwg.mxu0
      %v653 = vadd.f32 %v498, %v575
      %v654 = vxor.u32 %v653, 2147483648
      %v655 = vmul.f32 %v654, 1.442695
      %v656 = vpow.pop %v655
      %v657 = vadd.f32 %v656, 1.0
      %v658 = vrcp.pop %v657
      %v659 = vmul.f32 1.0, %v658
      %660 = vrot.lane.b32.xlu0 %v479, 64
      %v661 = vpop.permute.xlu0 %660
      %v663 = vadd.f32 %v575, %v661
      %665 = vrot.lane.b32.xlu0 %v663, 64
      %v666 = vpop.permute.xlu0 %665
      %v668 = vmul.f32 %v659, %v666
      %670 = vrot.lane.b32.xlu0 %v668, 64
      %v671 = vpop.permute.xlu0 %670
      %v673 = vadd.f32 %v498, %v671
      %v674 = vtanh.pop %v673
      %v675 = vsub.f32 1.0, %v659
      %677 = vrot.lane.b32.xlu0 %v674, 96
      %v678 = vpop.permute.xlu0 %677
      %v680 = vmul.f32 %v675, %v678
      %v681 = vmul.f32 %v659, %v492
      %v682 = vadd.f32 %v680, %v681
      %v683 = vadd.f32 %v502, %v650
      %v684 = vxor.u32 %v683, 2147483648
      %v685 = vmul.f32 %v684, 1.442695
      %v686 = vpow.pop %v685
      %v687 = vadd.f32 %v686, 1.0
      %v688 = vrcp.pop %v687
      %v689 = vmul.f32 1.0, %v688
      %690 = vrot.lane.b32.xlu0 %v485, 64
      %v691 = vpop.permute.xlu0 %690
      %v693 = vadd.f32 %v650, %v691
      %695 = vrot.lane.b32.xlu0 %v693, 64
      %v696 = vpop.permute.xlu0 %695
      %v698 = vmul.f32 %v689, %v696
      %700 = vrot.lane.b32.xlu0 %v698, 64
      %v701 = vpop.permute.xlu0 %700
      %v703 = vadd.f32 %v502, %v701
      %v704 = vtanh.pop %v703
      %v705 = vsub.f32 1.0, %v689
      %707 = vrot.lane.b32.xlu0 %v704, 96
      %v708 = vpop.permute.xlu0 %707
      %v710 = vmul.f32 %v705, %v708
      %v711 = vmul.f32 %v689, %v493
      %v712 = vadd.f32 %v710, %v711
      %v713 = vmax.f32 %v494, %v682
      %v714 = vmax.f32 %v495, %v712
    $region78: #{tpu_custom_call.1} parent=1 // loop_footer
      %s491 = sadd.s32 1, %s487
    $region79: #{tpu_custom_call.1} parent=1 // loop_footer_branch
      %486 = sbr.rel target = $region75
    $region80: #{tpu_custom_call.1} parent=1 // loop_exit
      _
    %v715 = vld [vmem:[%s11] sm:$0xff]
    %v716 = vld [vmem:[%s11 + $0x8] sm:$0xff]
    %v717 = vld [vmem:[%s11 + $0x10] sm:$0xff]
    %v718 = vld [vmem:[%s11 + $0x18] sm:$0xff]
    %v719 = vld [vmem:[%s12] sm:$0xff]
    %v720 = vld [vmem:[%s12 + $0x8] sm:$0xff]
    %v721 = vld [vmem:[%s12 + $0x10] sm:$0xff]
    %v722 = vld [vmem:[%s12 + $0x18] sm:$0xff]
    %724 = vrot.lane.b32.xlu0 %v495, 96
    %v725 = vpop.permute.xlu0 %724
    %v726 = vsel %vm193, %v725, 0
    %728 = vmatprep.subr.mxu0 0.0
    %729 = vmatpush1.msra.mxu0 %v719
    %730 = vmatprep.subr.mxu0 0.0
    %731 = vmatpush1.msra.mxu0 %v720
    %732 = vmatprep.subr.mxu0 0.0
    %733 = vmatpush1.msra.mxu0 %v721
    %734 = vmatprep.subr.mxu0 0.0
    %735 = vmatpush1.msra.mxu0 %v722
    %736 = vmatprep.subr.mxu0 0.0
    %737 = vmatpush1.msra.mxu0 0.0
    %738 = vmatprep.subr.mxu0 0.0
    %739 = vmatpush1.msra.mxu0 0.0
    %740 = vmatprep.subr.mxu0 0.0
    %741 = vmatpush1.msra.mxu0 0.0
    %742 = vmatprep.subr.mxu0 0.0
    %743 = vmatpush1.msra.mxu0 0.0
    %744 = vmatprep.subr.mxu0 0.0
    %745 = vmatpush1.msra.mxu0 0.0
    %746 = vmatprep.subr.mxu0 0.0
    %747 = vmatpush1.msra.mxu0 0.0
    %748 = vmatprep.subr.mxu0 0.0
    %749 = vmatpush1.msra.mxu0 0.0
    %750 = vmatprep.subr.mxu0 0.0
    %751 = vmatpush1.msra.mxu0 0.0
    %752 = vmatprep.subr.mxu0 0.0
    %753 = vmatpush1.msra.mxu0 0.0
    %754 = vmatprep.subr.mxu0 0.0
    %755 = vmatpush1.msra.mxu0 0.0
    %756 = vmatprep.subr.mxu0 0.0
    %757 = vmatpush1.msra.mxu0 0.0
    %758 = vmatprep.subr.mxu0 0.0
    %759 = vmatpush1.msra.mxu0 0.0
    %760 = vmatprep.subr.mxu0 0.0
    %761 = vmatpush1.msra.mxu0 0.0
    %762 = vmatprep.subr.mxu0 0.0
    %763 = vmatpush1.msra.mxu0 0.0
    %764 = vmatprep.subr.mxu0 0.0
    %765 = vmatpush1.msra.mxu0 0.0
    %766 = vmatprep.subr.mxu0 0.0
    %767 = vmatpush1.msra.mxu0 0.0
    %768 = vmatprep.subr.mxu0 0.0
    %769 = vmatpush1.msra.mxu0 0.0
    %770 = vmatprep.subr.mxu0 0.0
    %771 = vmatpush1.msra.mxu0 0.0
    %772 = vmatprep.subr.mxu0 0.0
    %773 = vmatpush1.msra.mxu0 0.0
    %774 = vmatprep.subr.mxu0 0.0
    %775 = vmatpush1.msra.mxu0 0.0
    %776 = vmatprep.subr.mxu0 0.0
    %777 = vmatpush1.msra.mxu0 0.0
    %778 = vmatprep.subr.mxu0 0.0
    %779 = vmatpush1.msra.mxu0 0.0
    %780 = vmatprep.subr.mxu0 0.0
    %781 = vmatpush1.msra.mxu0 0.0
    %782 = vmatprep.subr.mxu0 0.0
    %783 = vmatpush1.msra.mxu0 0.0
    %784 = vmatprep.subr.mxu0 0.0
    %785 = vmatpush1.msra.mxu0 0.0
    %786 = vmatprep.subr.mxu0 0.0
    %787 = vmatpush1.msra.mxu0 0.0
    %788 = vmatprep.subr.mxu0 0.0
    %789 = vmatpush1.msra.mxu0 0.0
    %790 = vmatprep.subr.mxu0 0.0
    %791 = vmatpush1.msra.mxu0 0.0
    %792 = vmatprep.mubr.f32.mxu0 0.0
    %793 = vmatmul.mubr.f32.gmra.mrb[0].mxu0 %v726
    %v794 = vpop.f32.mrb[0].mxu0
    %v795 = vadd.f32 0.0, %v794
    %v796 = vpop.f32.mrb[0].mxu0
    %797 = vdwg.mxu0
    %799 = vrot.lane.b32.xlu0 %v494, 96
    %v800 = vpop.permute.xlu0 %799
    %v801 = vsel %vm193, %v800, 0
    %803 = vmatprep.subr.mxu0 0.0
    %804 = vmatpush1.msra.mxu0 %v715
    %805 = vmatprep.subr.mxu0 0.0
    %806 = vmatpush1.msra.mxu0 %v716
    %807 = vmatprep.subr.mxu0 0.0
    %808 = vmatpush1.msra.mxu0 %v717
    %809 = vmatprep.subr.mxu0 0.0
    %810 = vmatpush1.msra.mxu0 %v718
    %811 = vmatprep.subr.mxu0 0.0
    %812 = vmatpush1.msra.mxu0 0.0
    %813 = vmatprep.subr.mxu0 0.0
    %814 = vmatpush1.msra.mxu0 0.0
    %815 = vmatprep.subr.mxu0 0.0
    %816 = vmatpush1.msra.mxu0 0.0
    %817 = vmatprep.subr.mxu0 0.0
    %818 = vmatpush1.msra.mxu0 0.0
    %819 = vmatprep.subr.mxu0 0.0
    %820 = vmatpush1.msra.mxu0 0.0
    %821 = vmatprep.subr.mxu0 0.0
    %822 = vmatpush1.msra.mxu0 0.0
    %823 = vmatprep.subr.mxu0 0.0
    %824 = vmatpush1.msra.mxu0 0.0
    %825 = vmatprep.subr.mxu0 0.0
    %826 = vmatpush1.msra.mxu0 0.0
    %827 = vmatprep.subr.mxu0 0.0
    %828 = vmatpush1.msra.mxu0 0.0
    %829 = vmatprep.subr.mxu0 0.0
    %830 = vmatpush1.msra.mxu0 0.0
    %831 = vmatprep.subr.mxu0 0.0
    %832 = vmatpush1.msra.mxu0 0.0
    %833 = vmatprep.subr.mxu0 0.0
    %834 = vmatpush1.msra.mxu0 0.0
    %835 = vmatprep.subr.mxu0 0.0
    %836 = vmatpush1.msra.mxu0 0.0
    %837 = vmatprep.subr.mxu0 0.0
    %838 = vmatpush1.msra.mxu0 0.0
    %839 = vmatprep.subr.mxu0 0.0
    %840 = vmatpush1.msra.mxu0 0.0
    %841 = vmatprep.subr.mxu0 0.0
    %842 = vmatpush1.msra.mxu0 0.0
    %843 = vmatprep.subr.mxu0 0.0
    %844 = vmatpush1.msra.mxu0 0.0
    %845 = vmatprep.subr.mxu0 0.0
    %846 = vmatpush1.msra.mxu0 0.0
    %847 = vmatprep.subr.mxu0 0.0
    %848 = vmatpush1.msra.mxu0 0.0
    %849 = vmatprep.subr.mxu0 0.0
    %850 = vmatpush1.msra.mxu0 0.0
    %851 = vmatprep.subr.mxu0 0.0
    %852 = vmatpush1.msra.mxu0 0.0
    %853 = vmatprep.subr.mxu0 0.0
    %854 = vmatpush1.msra.mxu0 0.0
    %855 = vmatprep.subr.mxu0 0.0
    %856 = vmatpush1.msra.mxu0 0.0
    %857 = vmatprep.subr.mxu0 0.0
    %858 = vmatpush1.msra.mxu0 0.0
    %859 = vmatprep.subr.mxu0 0.0
    %860 = vmatpush1.msra.mxu0 0.0
    %861 = vmatprep.subr.mxu0 0.0
    %862 = vmatpush1.msra.mxu0 0.0
    %863 = vmatprep.subr.mxu0 0.0
    %864 = vmatpush1.msra.mxu0 0.0
    %865 = vmatprep.subr.mxu0 0.0
    %866 = vmatpush1.msra.mxu0 0.0
    %867 = vmatprep.mubr.f32.mxu0 0.0
    %868 = vmatmul.mubr.f32.gmra.mrb[0].mxu0 %v801
    %v869 = vpop.f32.mrb[0].mxu0
    %v870 = vadd.f32 %v795, %v869
    %v871 = vpop.f32.mrb[0].mxu0
    %872 = vdwg.mxu0
    %v873 = vld [vmem:[%s13] sm:$0x1]
    %v875 = vlaneseq
    %v876 = vshrl.u32 %v875, 7
    %v877 = vsub.s32 0, %v876
    %v878 = vrot.slane %v873, %v877
    %v880 = vadd.f32 %v870, %v878
    %v881 = vmax.f32 %v880, 0.0
    %v882 = vld [vmem:[%s14] sm:$0xff]
    %v883 = vld [vmem:[%s14 + $0x8] sm:$0xff]
    %v884 = vld [vmem:[%s14 + $0x10] sm:$0xff]
    %v885 = vld [vmem:[%s14 + $0x18] sm:$0xff]
    %v886 = vld [vmem:[%s14 + $0x20] sm:$0xff]
    %v887 = vld [vmem:[%s14 + $0x28] sm:$0xff]
    %v888 = vld [vmem:[%s14 + $0x30] sm:$0xff]
    %v889 = vld [vmem:[%s14 + $0x38] sm:$0xff]
    %v890 = vld [vmem:[#allocation4] sm:$0x1]
    %v892 = vlaneseq
    %v893 = vshrl.u32 %v892, 7
    %v894 = vsub.s32 0, %v893
    %v895 = vrot.slane %v890, %v894
    %v898 = vsel %vm98, %v881, 0
    %900 = vmatprep.subr.mxu0 0.0
    %901 = vmatpush1.msra.mxu0 %v882
    %902 = vmatprep.subr.mxu0 0.0
    %903 = vmatpush1.msra.mxu0 %v883
    %904 = vmatprep.subr.mxu0 0.0
    %905 = vmatpush1.msra.mxu0 %v884
    %906 = vmatprep.subr.mxu0 0.0
    %907 = vmatpush1.msra.mxu0 %v885
    %908 = vmatprep.subr.mxu0 0.0
    %909 = vmatpush1.msra.mxu0 %v886
    %910 = vmatprep.subr.mxu0 0.0
    %911 = vmatpush1.msra.mxu0 %v887
    %912 = vmatprep.subr.mxu0 0.0
    %913 = vmatpush1.msra.mxu0 %v888
    %914 = vmatprep.subr.mxu0 0.0
    %915 = vmatpush1.msra.mxu0 %v889
    %916 = vmatprep.subr.mxu0 0.0
    %917 = vmatpush1.msra.mxu0 0.0
    %918 = vmatprep.subr.mxu0 0.0
    %919 = vmatpush1.msra.mxu0 0.0
    %920 = vmatprep.subr.mxu0 0.0
    %921 = vmatpush1.msra.mxu0 0.0
    %922 = vmatprep.subr.mxu0 0.0
    %923 = vmatpush1.msra.mxu0 0.0
    %924 = vmatprep.subr.mxu0 0.0
    %925 = vmatpush1.msra.mxu0 0.0
    %926 = vmatprep.subr.mxu0 0.0
    %927 = vmatpush1.msra.mxu0 0.0
    %928 = vmatprep.subr.mxu0 0.0
    %929 = vmatpush1.msra.mxu0 0.0
    %930 = vmatprep.subr.mxu0 0.0
    %931 = vmatpush1.msra.mxu0 0.0
    %932 = vmatprep.subr.mxu0 0.0
    %933 = vmatpush1.msra.mxu0 0.0
    %934 = vmatprep.subr.mxu0 0.0
    %935 = vmatpush1.msra.mxu0 0.0
    %936 = vmatprep.subr.mxu0 0.0
    %937 = vmatpush1.msra.mxu0 0.0
    %938 = vmatprep.subr.mxu0 0.0
    %939 = vmatpush1.msra.mxu0 0.0
    %940 = vmatprep.subr.mxu0 0.0
    %941 = vmatpush1.msra.mxu0 0.0
    %942 = vmatprep.subr.mxu0 0.0
    %943 = vmatpush1.msra.mxu0 0.0
    %944 = vmatprep.subr.mxu0 0.0
    %945 = vmatpush1.msra.mxu0 0.0
    %946 = vmatprep.subr.mxu0 0.0
    %947 = vmatpush1.msra.mxu0 0.0
    %948 = vmatprep.subr.mxu0 0.0
    %949 = vmatpush1.msra.mxu0 0.0
    %950 = vmatprep.subr.mxu0 0.0
    %951 = vmatpush1.msra.mxu0 0.0
    %952 = vmatprep.subr.mxu0 0.0
    %953 = vmatpush1.msra.mxu0 0.0
    %954 = vmatprep.subr.mxu0 0.0
    %955 = vmatpush1.msra.mxu0 0.0
    %956 = vmatprep.subr.mxu0 0.0
    %957 = vmatpush1.msra.mxu0 0.0
    %958 = vmatprep.subr.mxu0 0.0
    %959 = vmatpush1.msra.mxu0 0.0
    %960 = vmatprep.subr.mxu0 0.0
    %961 = vmatpush1.msra.mxu0 0.0
    %962 = vmatprep.subr.mxu0 0.0
    %963 = vmatpush1.msra.mxu0 0.0
    %964 = vmatprep.mubr.f32.mxu0 0.0
    %965 = vmatmul.mubr.f32.gmra.mrb[0].mxu0 %v898
    %v966 = vpop.f32.mrb[0].mxu0
    %v967 = vadd.f32 %v895, %v966
    %v968 = vpop.f32.mrb[0].mxu0
    %969 = vdwg.mxu0
    %vm970 = vcmask 1024
    %971 = vst.msk [vmem:[%s16] sm:$0x3] %vm970, %v967
    // Predicated region
    $region81: #{tpu_custom_call.1} parent=1 // pred_check
      _
    $region82: #{tpu_custom_call.1} parent=1 // pred_check_branch
      %973 = sbr.rel (0) target = $region84
    $region83: #{tpu_custom_call.1} parent=1 // pred_region
      _
    $region84: #{tpu_custom_call.1} parent=1 // pred_fallthru
      _
    // Predicated region
    $region85: #{tpu_custom_call.1} parent=1 // pred_check
      _
    $region86: #{tpu_custom_call.1} parent=1 // pred_check_branch
      %975 = sbr.rel (0) target = $region88
    $region87: #{tpu_custom_call.1} parent=1 // pred_region
      _
    $region88: #{tpu_custom_call.1} parent=1 // pred_fallthru
      _
    %976 = vsyncpa [#allocation6], 1
    %977 = vsyncpa [#allocation8], 1

</llo_original>
